<compile_context>
chip_gen: v5e
topology: v5e:2x2
jax: 0.10.0
libtpu: 0.0.40
codegen_flags: <defaults>
</compile_context>

<pallas_src>
import numpy as np
import jax
import jax.numpy as jnp
from jax.experimental import pallas as pl
from jax.experimental.pallas import tpu as pltpu

# ----- model dimensions (small, consistent with the module's __init__) -----
B = 8            # batch
D_IN = 32        # input_dim
HID = [64, 32]   # hidden_dims (shared by qyx / qzyx / pxz, the default behaviour)
LAT = 16         # latent_dim
K = 8            # n_components
BN_EPS = 1e-5
LANES = 128

# ---------------------------------------------------------------------------
# Packed-parameter slab layout (single (SLAB_ROWS, 128) f32 array).
# Each weight matrix occupies a row band [row, row+fan_in) at lanes [0, fan_out).
# Each bias / BN vector occupies a single row at lanes [0, width).
# ---------------------------------------------------------------------------
_MAT_SPECS = [
    ('qyx_w0', D_IN, HID[0]),
    ('qyx_w1', HID[0], HID[1]),
    ('qyx_wf', HID[1], K),
    ('qz_w0', D_IN + K, HID[0]),
    ('qz_w1', HID[0], HID[1]),
    ('qz_wmuls', HID[1], 2 * LAT),   # fused [qz_wmu | qz_wls]
    ('emb', K, 2 * LAT),             # fused [mu_emb | lv_emb]
    ('px_w0', LAT, HID[1]),
    ('px_w1', HID[1], HID[0]),
    ('px_wf', HID[0], D_IN),
]
_VEC_SPECS = [
    ('qyx_b0', HID[0]), ('qyx_g0', HID[0]), ('qyx_be0', HID[0]),
    ('qyx_b1', HID[1]), ('qyx_g1', HID[1]), ('qyx_be1', HID[1]),
    ('qyx_bf', K),
    ('qz_b0', HID[0]), ('qz_g0', HID[0]), ('qz_be0', HID[0]),
    ('qz_b1', HID[1]), ('qz_g1', HID[1]), ('qz_be1', HID[1]),
    ('qz_bmuls', 2 * LAT),           # fused [qz_bmu | qz_bls]
    ('px_b0', HID[1]), ('px_g0', HID[1]), ('px_be0', HID[1]),
    ('px_b1', HID[0]), ('px_g1', HID[0]), ('px_be1', HID[0]),
    ('px_bf', D_IN),
]


def _build_layout():
    mats, vecs = {}, {}
    row = 0
    for name, fi, fo in _MAT_SPECS:
        mats[name] = (row, fi, fo)
        row += fi                     # all fan_ins are multiples of 8 -> bands stay 8-aligned
    for name, fo in _VEC_SPECS:
        vecs[name] = (row, fo)
        row += 1
    total = ((row + 7) // 8) * 8
    return mats, vecs, total


MAT_LAYOUT, VEC_LAYOUT, SLAB_ROWS = _build_layout()

# Output slab layout: exactly 128 lanes.
_OUT_SPECS = [
    ('recons', D_IN), ('latents', LAT), ('mu', LAT), ('logvar', LAT),
    ('logits', K), ('probs', K),
    ('mu_component_prior', LAT), ('logvar_component_prior', LAT),
]
OUT_OFFSETS = {}
_off = 0
for _name, _w in _OUT_SPECS:
    OUT_OFFSETS[_name] = (_off, _w)
    _off += _w
assert _off == LANES


# ---------------------------------------------------------------------------
# Kernel
# ---------------------------------------------------------------------------
def gmvae_kernel(x_ref, eps_ref, alpha_ref, w_ref, out_ref, y_ref):
    # Read PReLU slopes from SMEM once, at kernel entry.
    a0 = alpha_ref[0]
    a1 = alpha_ref[1]
    a2 = alpha_ref[2]
    a3 = alpha_ref[3]
    a4 = alpha_ref[4]
    a5 = alpha_ref[5]

    x = x_ref[...]
    eps = eps_ref[...]

    def mat(name):
        r, fi, fo = MAT_LAYOUT[name]
        return w_ref[r:r + fi, 0:fo]

    def vec(name):
        r, fo = VEC_LAYOUT[name]
        return w_ref[r:r + 1, 0:fo]

    def lin(h, wname, bname):
        return jnp.dot(h, mat(wname), preferred_element_type=jnp.float32) + vec(bname)

    def bn_prelu(h, gname, bname, a):
        # BatchNorm1d training mode: batch mean, biased batch variance.
        m = jnp.mean(h, axis=0, keepdims=True)
        d = h - m
        v = jnp.mean(d * d, axis=0, keepdims=True)
        h = d * jax.lax.rsqrt(v + BN_EPS) * vec(gname) + vec(bname)
        return jnp.where(h >= 0.0, h, a * h)

    # ---------------- q(y|x): [Linear+BN+PReLU] x2 -> Linear -> softmax/argmax ----
    h = bn_prelu(lin(x, 'qyx_w0', 'qyx_b0'), 'qyx_g0', 'qyx_be0', a0)
    h = bn_prelu(lin(h, 'qyx_w1', 'qyx_b1'), 'qyx_g1', 'qyx_be1', a1)
    logits = lin(h, 'qyx_wf', 'qyx_bf')                              # (B, K)

    mx = jnp.max(logits, axis=1, keepdims=True)
    e = jnp.exp(logits - mx)
    probs = e / jnp.sum(e, axis=1, keepdims=True)

    col = jax.lax.broadcasted_iota(jnp.int32, probs.shape, 1)        # (B, K)
    pmax = jnp.max(probs, axis=1, keepdims=True)
    y = jnp.min(jnp.where(probs >= pmax, col, K), axis=1, keepdims=True)  # first argmax
    y_ref[...] = y

    # ---------------- q(z|y,x): concat(x, logits) -> MLP -> fused mu/logsigma -----
    xy = jnp.concatenate([x, logits], axis=1)                        # (B, D_IN + K)
    h = bn_prelu(lin(xy, 'qz_w0', 'qz_b0'), 'qz_g0', 'qz_be0', a2)
    h = bn_prelu(lin(h, 'qz_w1', 'qz_b1'), 'qz_g1', 'qz_be1', a3)
    muls = lin(h, 'qz_wmuls', 'qz_bmuls')                            # (B, 2*LAT)
    mu = muls[:, 0:LAT]
    logvar = muls[:, LAT:2 * LAT]
    z = eps * jnp.exp(0.5 * logvar) + mu

    # ---------------- p(z|y): fused embedding lookup via one-hot matmul -----------
    onehot = (col == y).astype(jnp.float32)                          # (B, K)
    priors = jnp.dot(onehot, mat('emb'), preferred_element_type=jnp.float32)  # (B, 2*LAT)
    mu_prior = priors[:, 0:LAT]
    logvar_prior = priors[:, LAT:2 * LAT]
    # TODO(synk): z_prior = eps*exp(0.5*logvar_prior)+mu_prior is computed in PyTorch
    # but never returned by GaussianMixtureVAE.forward, so it is skipped here.

    # ---------------- p(x|z): [Linear+BN+PReLU] x2 -> Linear -----------------------
    h = bn_prelu(lin(z, 'px_w0', 'px_b0'), 'px_g0', 'px_be0', a4)
    h = bn_prelu(lin(h, 'px_w1', 'px_b1'), 'px_g1', 'px_be1', a5)
    recons = lin(h, 'px_wf', 'px_bf')                                # (B, D_IN)

    # ---------------- single lane-dense (B, 128) output store ---------------------
    out_ref[...] = jnp.concatenate(
        [recons, z, mu, logvar, logits, probs, mu_prior, logvar_prior], axis=1)


# ---------------------------------------------------------------------------
# Parameter init (PyTorch-equivalent) and host-side packing
# ---------------------------------------------------------------------------
def init_params(key):
    keys = iter(jax.random.split(key, 40))

    def linear(fan_in, fan_out):
        kw, kb = jax.random.split(next(keys))
        bound = 1.0 / np.sqrt(fan_in)
        w = jax.random.uniform(kw, (fan_in, fan_out), jnp.float32, -bound, bound)
        b = jax.random.uniform(kb, (1, fan_out), jnp.float32, -bound, bound)
        return w, b

    def bn(n):
        return jnp.ones((1, n), jnp.float32), jnp.zeros((1, n), jnp.float32)

    p = {}
    # q(y|x)
    p['qyx_w0'], p['qyx_b0'] = linear(D_IN, HID[0]); p['qyx_g0'], p['qyx_be0'] = bn(HID[0])
    p['qyx_w1'], p['qyx_b1'] = linear(HID[0], HID[1]); p['qyx_g1'], p['qyx_be1'] = bn(HID[1])
    p['qyx_wf'], p['qyx_bf'] = linear(HID[1], K)
    # q(z|y,x)  (input is concat(x, logits) -> D_IN + K)
    p['qz_w0'], p['qz_b0'] = linear(D_IN + K, HID[0]); p['qz_g0'], p['qz_be0'] = bn(HID[0])
    p['qz_w1'], p['qz_b1'] = linear(HID[0], HID[1]); p['qz_g1'], p['qz_be1'] = bn(HID[1])
    p['qz_wmu'], p['qz_bmu'] = linear(HID[1], LAT)
    p['qz_wls'], p['qz_bls'] = linear(HID[1], LAT)
    # p(z|y): two Embedding tables (n_components, latent_dim)
    p['mu_emb'] = jax.random.normal(next(keys), (K, LAT), jnp.float32)
    p['lv_emb'] = jax.random.normal(next(keys), (K, LAT), jnp.float32) * 0.1
    # p(x|z): Linear(LAT, HID[-1]) -> Linear(HID[-1], HID[-2]) -> Linear(HID[0], D_IN)
    p['px_w0'], p['px_b0'] = linear(LAT, HID[-1]); p['px_g0'], p['px_be0'] = bn(HID[-1])
    p['px_w1'], p['px_b1'] = linear(HID[-1], HID[-2]); p['px_g1'], p['px_be1'] = bn(HID[-2])
    p['px_wf'], p['px_bf'] = linear(HID[0], D_IN)
    # PReLU slopes (PyTorch default init 0.25): qyx x2, qzyx x2, pxz x2
    p['alphas'] = jnp.full((6,), 0.25, jnp.float32)
    return p


def pack_params(params):
    """One-time host-side packing of all parameters into a single (SLAB_ROWS, 128) slab."""
    p = {k: np.asarray(v, np.float32) for k, v in params.items()}
    fused = dict(p)
    fused['qz_wmuls'] = np.concatenate([p['qz_wmu'], p['qz_wls']], axis=1)
    fused['qz_bmuls'] = np.concatenate([p['qz_bmu'], p['qz_bls']], axis=1)
    fused['emb'] = np.concatenate([p['mu_emb'], p['lv_emb']], axis=1)

    slab = np.zeros((SLAB_ROWS, LANES), np.float32)
    for name, (r, fi, fo) in MAT_LAYOUT.items():
        slab[r:r + fi, 0:fo] = fused[name]
    for name, (r, fo) in VEC_LAYOUT.items():
        slab[r, 0:fo] = fused[name].reshape(-1)
    return jnp.asarray(slab), jnp.asarray(p['alphas'], dtype=np.float32)


# ---------------------------------------------------------------------------
# Forward wrapper
# ---------------------------------------------------------------------------
@jax.jit
def gmvae_forward(x, eps, alphas, w_slab):
    vmem = pl.BlockSpec(memory_space=pltpu.MemorySpace.VMEM)
    smem = pl.BlockSpec(memory_space=pltpu.MemorySpace.SMEM)
    out_shape = (
        jax.ShapeDtypeStruct((B, LANES), jnp.float32),   # packed float outputs
        jax.ShapeDtypeStruct((B, 1), jnp.int32),         # component labels
    )
    cost = pl.CostEstimate(flops=250_000, transcendentals=600, bytes_accessed=215_000)
    slab_out, y = pl.pallas_call(
        gmvae_kernel,
        out_shape=out_shape,
        in_specs=[vmem, vmem, smem, vmem],
        out_specs=(vmem, vmem),
        cost_estimate=cost,
    )(x, eps, alphas, w_slab)

    out = {name: slab_out[:, o:o + w] for name, (o, w) in OUT_OFFSETS.items()}
    out['component_labels'] = y[:, 0]
    return out


# ---------------------------------------------------------------------------
# Pure NumPy (float64) reference of the PyTorch forward semantics
# ---------------------------------------------------------------------------
def gmvae_reference(x, eps, params):
    P = {k: np.asarray(v, np.float64) for k, v in params.items()}
    x = np.asarray(x, np.float64)
    eps_np = np.asarray(eps, np.float64)

    def lin(h, w, b):
        return h @ P[w] + P[b]

    def bn(h, g, b):
        m = h.mean(axis=0, keepdims=True)
        v = h.var(axis=0, keepdims=True)           # biased variance (training-mode BN)
        return (h - m) / np.sqrt(v + BN_EPS) * P[g] + P[b]

    def prelu(h, i):
        a = float(P['alphas'][i])
        return np.where(h >= 0, h, a * h)

    h = prelu(bn(lin(x, 'qyx_w0', 'qyx_b0'), 'qyx_g0', 'qyx_be0'), 0)
    h = prelu(bn(lin(h, 'qyx_w1', 'qyx_b1'), 'qyx_g1', 'qyx_be1'), 1)
    logits = lin(h, 'qyx_wf', 'qyx_bf')
    e = np.exp(logits - logits.max(axis=1, keepdims=True))
    probs = e / e.sum(axis=1, keepdims=True)
    y = probs.argmax(axis=1)

    xy = np.concatenate([x, logits], axis=1)
    h = prelu(bn(lin(xy, 'qz_w0', 'qz_b0'), 'qz_g0', 'qz_be0'), 2)
    h = prelu(bn(lin(h, 'qz_w1', 'qz_b1'), 'qz_g1', 'qz_be1'), 3)
    mu = lin(h, 'qz_wmu', 'qz_bmu')
    logvar = lin(h, 'qz_wls', 'qz_bls')
    z = eps_np * np.exp(0.5 * logvar) + mu

    mu_prior = P['mu_emb'][y]
    logvar_prior = P['lv_emb'][y]

    h = prelu(bn(lin(z, 'px_w0', 'px_b0'), 'px_g0', 'px_be0'), 4)
    h = prelu(bn(lin(h, 'px_w1', 'px_b1'), 'px_g1', 'px_be1'), 5)
    recons = lin(h, 'px_wf', 'px_bf')

    return {'recons': recons, 'latents': z, 'mu': mu, 'logvar': logvar,
            'logits': logits, 'probs': probs, 'component_labels': y,
            'mu_component_prior': mu_prior, 'logvar_component_prior': logvar_prior}


if __name__ == "__main__":
    key = jax.random.PRNGKey(0)
    k_param, k_x, k_eps = jax.random.split(key, 3)

    params = init_params(k_param)
    w_slab, alphas = pack_params(params)
    x = jax.random.normal(k_x, (B, D_IN), jnp.float32)
    eps = jax.random.normal(k_eps, (B, LAT), jnp.float32)

    out = gmvae_forward(x, eps, alphas, w_slab)
    out = jax.tree_util.tree_map(jax.block_until_ready, out)

    ref = gmvae_reference(x, eps, params)
    assert np.array_equal(np.asarray(out['component_labels']),
                          ref['component_labels'].astype(np.int32))
    for name in ['recons', 'latents', 'mu', 'logvar', 'logits', 'probs',
                 'mu_component_prior', 'logvar_component_prior']:
        np.testing.assert_allclose(np.asarray(out[name]), ref[name], rtol=2e-2, atol=2e-2)

    print("KERNEL_OK")
</pallas_src>

<mosaic_0001>
module attributes {stable_mosaic.version = 11 : i64} {
  func.func @gmvae_kernel(%arg0: memref<8x32xf32, #tpu.memory_space<vmem>>, %arg1: memref<8x16xf32, #tpu.memory_space<vmem>>, %arg2: memref<6xf32, #tpu.memory_space<smem>>, %arg3: memref<408x128xf32, #tpu.memory_space<vmem>>, %arg4: memref<8x128xf32, #tpu.memory_space<vmem>>, %arg5: memref<8x1xi32, #tpu.memory_space<vmem>>) attributes {dimension_semantics = [], scalar_prefetch = 0 : i64, scratch_operands = 0 : i64, tpu.core_type = #tpu.core_type<tc>} {
    %c0 = arith.constant 0 : index
    %0 = memref.load %arg2[%c0] : memref<6xf32, #tpu.memory_space<smem>>
    %c1 = arith.constant 1 : index
    %1 = memref.load %arg2[%c1] : memref<6xf32, #tpu.memory_space<smem>>
    %c2 = arith.constant 2 : index
    %2 = memref.load %arg2[%c2] : memref<6xf32, #tpu.memory_space<smem>>
    %c3 = arith.constant 3 : index
    %3 = memref.load %arg2[%c3] : memref<6xf32, #tpu.memory_space<smem>>
    %c4 = arith.constant 4 : index
    %4 = memref.load %arg2[%c4] : memref<6xf32, #tpu.memory_space<smem>>
    %c5 = arith.constant 5 : index
    %5 = memref.load %arg2[%c5] : memref<6xf32, #tpu.memory_space<smem>>
    %c0_0 = arith.constant 0 : index
    %c0_1 = arith.constant 0 : index
    %6 = vector.load %arg0[%c0_0, %c0_1] : memref<8x32xf32, #tpu.memory_space<vmem>>, vector<8x32xf32>
    %c0_2 = arith.constant 0 : index
    %c0_3 = arith.constant 0 : index
    %7 = vector.load %arg1[%c0_2, %c0_3] : memref<8x16xf32, #tpu.memory_space<vmem>>, vector<8x16xf32>
    %c0_4 = arith.constant 0 : index
    %c0_5 = arith.constant 0 : index
    %8 = vector.load %arg3[%c0_4, %c0_5] : memref<408x128xf32, #tpu.memory_space<vmem>>, vector<32x64xf32>
    %cst = arith.constant dense<0.000000e+00> : vector<8x64xf32>
    %9 = tpu.matmul %6, %8, %cst {dimension_numbers = #tpu.dot_dimension_numbers<[1], [0], [0], [1], [0, 0, 1, 1], [], []>} : vector<8x32xf32>, vector<32x64xf32>, vector<8x64xf32> -> vector<8x64xf32>
    %c384 = arith.constant 384 : index
    %c0_6 = arith.constant 0 : index
    %10 = vector.load %arg3[%c384, %c0_6] : memref<408x128xf32, #tpu.memory_space<vmem>>, vector<1x64xf32>
    %11 = vector.broadcast %10 : vector<1x64xf32> to vector<8x64xf32>
    %12 = arith.addf %9, %11 : vector<8x64xf32>
    %cst_7 = arith.constant dense<0.000000e+00> : vector<64xf32>
    %13 = vector.multi_reduction <add>, %12, %cst_7 [0] : vector<8x64xf32> to vector<64xf32>
    %14 = vector.shape_cast %13 : vector<64xf32> to vector<1x64xf32>
    %cst_8 = arith.constant 8.000000e+00 : f32
    %15 = vector.broadcast %cst_8 : f32 to vector<1x64xf32>
    %16 = arith.divf %14, %15 : vector<1x64xf32>
    %17 = vector.broadcast %16 : vector<1x64xf32> to vector<8x64xf32>
    %18 = arith.subf %12, %17 : vector<8x64xf32>
    %19 = arith.mulf %18, %18 : vector<8x64xf32>
    %cst_9 = arith.constant dense<0.000000e+00> : vector<64xf32>
    %20 = vector.multi_reduction <add>, %19, %cst_9 [0] : vector<8x64xf32> to vector<64xf32>
    %21 = vector.shape_cast %20 : vector<64xf32> to vector<1x64xf32>
    %cst_10 = arith.constant 8.000000e+00 : f32
    %22 = vector.broadcast %cst_10 : f32 to vector<1x64xf32>
    %23 = arith.divf %21, %22 : vector<1x64xf32>
    %cst_11 = arith.constant 9.99999974E-6 : f32
    %24 = vector.broadcast %cst_11 : f32 to vector<1x64xf32>
    %25 = arith.addf %23, %24 : vector<1x64xf32>
    %26 = math.rsqrt %25 : vector<1x64xf32>
    %27 = vector.broadcast %26 : vector<1x64xf32> to vector<8x64xf32>
    %28 = arith.mulf %18, %27 : vector<8x64xf32>
    %c385 = arith.constant 385 : index
    %c0_12 = arith.constant 0 : index
    %29 = vector.load %arg3[%c385, %c0_12] : memref<408x128xf32, #tpu.memory_space<vmem>>, vector<1x64xf32>
    %30 = vector.broadcast %29 : vector<1x64xf32> to vector<8x64xf32>
    %31 = arith.mulf %28, %30 : vector<8x64xf32>
    %c386 = arith.constant 386 : index
    %c0_13 = arith.constant 0 : index
    %32 = vector.load %arg3[%c386, %c0_13] : memref<408x128xf32, #tpu.memory_space<vmem>>, vector<1x64xf32>
    %33 = vector.broadcast %32 : vector<1x64xf32> to vector<8x64xf32>
    %34 = arith.addf %31, %33 : vector<8x64xf32>
    %cst_14 = arith.constant 0.000000e+00 : f32
    %35 = vector.broadcast %cst_14 : f32 to vector<8x64xf32>
    %36 = arith.cmpf oge, %34, %35 : vector<8x64xf32>
    %37 = vector.broadcast %0 : f32 to vector<8x64xf32>
    %38 = arith.mulf %37, %34 : vector<8x64xf32>
    %39 = arith.select %36, %34, %38 : vector<8x64xi1>, vector<8x64xf32>
    %c32 = arith.constant 32 : index
    %c0_15 = arith.constant 0 : index
    %40 = vector.load %arg3[%c32, %c0_15] : memref<408x128xf32, #tpu.memory_space<vmem>>, vector<64x32xf32>
    %cst_16 = arith.constant dense<0.000000e+00> : vector<8x32xf32>
    %41 = tpu.matmul %39, %40, %cst_16 {dimension_numbers = #tpu.dot_dimension_numbers<[1], [0], [0], [1], [0, 0, 1, 1], [], []>} : vector<8x64xf32>, vector<64x32xf32>, vector<8x32xf32> -> vector<8x32xf32>
    %c387 = arith.constant 387 : index
    %c0_17 = arith.constant 0 : index
    %42 = vector.load %arg3[%c387, %c0_17] : memref<408x128xf32, #tpu.memory_space<vmem>>, vector<1x32xf32>
    %43 = vector.broadcast %42 : vector<1x32xf32> to vector<8x32xf32>
    %44 = arith.addf %41, %43 : vector<8x32xf32>
    %cst_18 = arith.constant dense<0.000000e+00> : vector<32xf32>
    %45 = vector.multi_reduction <add>, %44, %cst_18 [0] : vector<8x32xf32> to vector<32xf32>
    %46 = vector.shape_cast %45 : vector<32xf32> to vector<1x32xf32>
    %cst_19 = arith.constant 8.000000e+00 : f32
    %47 = vector.broadcast %cst_19 : f32 to vector<1x32xf32>
    %48 = arith.divf %46, %47 : vector<1x32xf32>
    %49 = vector.broadcast %48 : vector<1x32xf32> to vector<8x32xf32>
    %50 = arith.subf %44, %49 : vector<8x32xf32>
    %51 = arith.mulf %50, %50 : vector<8x32xf32>
    %cst_20 = arith.constant dense<0.000000e+00> : vector<32xf32>
    %52 = vector.multi_reduction <add>, %51, %cst_20 [0] : vector<8x32xf32> to vector<32xf32>
    %53 = vector.shape_cast %52 : vector<32xf32> to vector<1x32xf32>
    %cst_21 = arith.constant 8.000000e+00 : f32
    %54 = vector.broadcast %cst_21 : f32 to vector<1x32xf32>
    %55 = arith.divf %53, %54 : vector<1x32xf32>
    %cst_22 = arith.constant 9.99999974E-6 : f32
    %56 = vector.broadcast %cst_22 : f32 to vector<1x32xf32>
    %57 = arith.addf %55, %56 : vector<1x32xf32>
    %58 = math.rsqrt %57 : vector<1x32xf32>
    %59 = vector.broadcast %58 : vector<1x32xf32> to vector<8x32xf32>
    %60 = arith.mulf %50, %59 : vector<8x32xf32>
    %c388 = arith.constant 388 : index
    %c0_23 = arith.constant 0 : index
    %61 = vector.load %arg3[%c388, %c0_23] : memref<408x128xf32, #tpu.memory_space<vmem>>, vector<1x32xf32>
    %62 = vector.broadcast %61 : vector<1x32xf32> to vector<8x32xf32>
    %63 = arith.mulf %60, %62 : vector<8x32xf32>
    %c389 = arith.constant 389 : index
    %c0_24 = arith.constant 0 : index
    %64 = vector.load %arg3[%c389, %c0_24] : memref<408x128xf32, #tpu.memory_space<vmem>>, vector<1x32xf32>
    %65 = vector.broadcast %64 : vector<1x32xf32> to vector<8x32xf32>
    %66 = arith.addf %63, %65 : vector<8x32xf32>
    %cst_25 = arith.constant 0.000000e+00 : f32
    %67 = vector.broadcast %cst_25 : f32 to vector<8x32xf32>
    %68 = arith.cmpf oge, %66, %67 : vector<8x32xf32>
    %69 = vector.broadcast %1 : f32 to vector<8x32xf32>
    %70 = arith.mulf %69, %66 : vector<8x32xf32>
    %71 = arith.select %68, %66, %70 : vector<8x32xi1>, vector<8x32xf32>
    %c96 = arith.constant 96 : index
    %c0_26 = arith.constant 0 : index
    %72 = vector.load %arg3[%c96, %c0_26] : memref<408x128xf32, #tpu.memory_space<vmem>>, vector<32x8xf32>
    %cst_27 = arith.constant dense<0.000000e+00> : vector<8x8xf32>
    %73 = tpu.matmul %71, %72, %cst_27 {dimension_numbers = #tpu.dot_dimension_numbers<[1], [0], [0], [1], [0, 0, 1, 1], [], []>} : vector<8x32xf32>, vector<32x8xf32>, vector<8x8xf32> -> vector<8x8xf32>
    %c390 = arith.constant 390 : index
    %c0_28 = arith.constant 0 : index
    %74 = vector.load %arg3[%c390, %c0_28] : memref<408x128xf32, #tpu.memory_space<vmem>>, vector<1x8xf32>
    %75 = vector.broadcast %74 : vector<1x8xf32> to vector<8x8xf32>
    %76 = arith.addf %73, %75 : vector<8x8xf32>
    %cst_29 = arith.constant dense<0xFF800000> : vector<8xf32>
    %77 = vector.multi_reduction <maximumf>, %76, %cst_29 [1] : vector<8x8xf32> to vector<8xf32>
    %78 = vector.shape_cast %77 : vector<8xf32> to vector<8x1xf32>
    %79 = vector.broadcast %78 : vector<8x1xf32> to vector<8x8xf32>
    %80 = arith.subf %76, %79 : vector<8x8xf32>
    %81 = math.exp %80 : vector<8x8xf32>
    %cst_30 = arith.constant dense<0.000000e+00> : vector<8xf32>
    %82 = vector.multi_reduction <add>, %81, %cst_30 [1] : vector<8x8xf32> to vector<8xf32>
    %83 = vector.shape_cast %82 : vector<8xf32> to vector<8x1xf32>
    %84 = vector.broadcast %83 : vector<8x1xf32> to vector<8x8xf32>
    %85 = arith.divf %81, %84 : vector<8x8xf32>
    %86 = tpu.iota {dimensions = array<i32: 1>} : vector<8x8xi32>
    %cst_31 = arith.constant dense<0xFF800000> : vector<8xf32>
    %87 = vector.multi_reduction <maximumf>, %85, %cst_31 [1] : vector<8x8xf32> to vector<8xf32>
    %88 = vector.shape_cast %87 : vector<8xf32> to vector<8x1xf32>
    %89 = vector.broadcast %88 : vector<8x1xf32> to vector<8x8xf32>
    %90 = arith.cmpf oge, %85, %89 : vector<8x8xf32>
    %c8_i32 = arith.constant 8 : i32
    %91 = vector.broadcast %c8_i32 : i32 to vector<8x8xi32>
    %92 = arith.select %90, %86, %91 : vector<8x8xi1>, vector<8x8xi32>
    %cst_32 = arith.constant dense<2147483647> : vector<8xi32>
    %93 = vector.multi_reduction <minsi>, %92, %cst_32 [1] : vector<8x8xi32> to vector<8xi32>
    %94 = vector.shape_cast %93 : vector<8xi32> to vector<8x1xi32>
    %c0_33 = arith.constant 0 : index
    %c0_34 = arith.constant 0 : index
    %95 = vector.load %arg5[%c0_33, %c0_34] : memref<8x1xi32, #tpu.memory_space<vmem>>, vector<8x1xi32>
    tpu.vector_store %arg5[%c0_33, %c0_34], %94 {strides = array<i32>} : memref<8x1xi32, #tpu.memory_space<vmem>>, vector<8x1xi32>,
    %96 = tpu.concatenate %6, %76 in 1 : vector<8x32xf32>, vector<8x8xf32> -> vector<8x40xf32>
    %c128 = arith.constant 128 : index
    %c0_35 = arith.constant 0 : index
    %97 = vector.load %arg3[%c128, %c0_35] : memref<408x128xf32, #tpu.memory_space<vmem>>, vector<40x64xf32>
    %cst_36 = arith.constant dense<0.000000e+00> : vector<8x64xf32>
    %98 = tpu.matmul %96, %97, %cst_36 {dimension_numbers = #tpu.dot_dimension_numbers<[1], [0], [0], [1], [0, 0, 1, 1], [], []>} : vector<8x40xf32>, vector<40x64xf32>, vector<8x64xf32> -> vector<8x64xf32>
    %c391 = arith.constant 391 : index
    %c0_37 = arith.constant 0 : index
    %99 = vector.load %arg3[%c391, %c0_37] : memref<408x128xf32, #tpu.memory_space<vmem>>, vector<1x64xf32>
    %100 = vector.broadcast %99 : vector<1x64xf32> to vector<8x64xf32>
    %101 = arith.addf %98, %100 : vector<8x64xf32>
    %cst_38 = arith.constant dense<0.000000e+00> : vector<64xf32>
    %102 = vector.multi_reduction <add>, %101, %cst_38 [0] : vector<8x64xf32> to vector<64xf32>
    %103 = vector.shape_cast %102 : vector<64xf32> to vector<1x64xf32>
    %cst_39 = arith.constant 8.000000e+00 : f32
    %104 = vector.broadcast %cst_39 : f32 to vector<1x64xf32>
    %105 = arith.divf %103, %104 : vector<1x64xf32>
    %106 = vector.broadcast %105 : vector<1x64xf32> to vector<8x64xf32>
    %107 = arith.subf %101, %106 : vector<8x64xf32>
    %108 = arith.mulf %107, %107 : vector<8x64xf32>
    %cst_40 = arith.constant dense<0.000000e+00> : vector<64xf32>
    %109 = vector.multi_reduction <add>, %108, %cst_40 [0] : vector<8x64xf32> to vector<64xf32>
    %110 = vector.shape_cast %109 : vector<64xf32> to vector<1x64xf32>
    %cst_41 = arith.constant 8.000000e+00 : f32
    %111 = vector.broadcast %cst_41 : f32 to vector<1x64xf32>
    %112 = arith.divf %110, %111 : vector<1x64xf32>
    %cst_42 = arith.constant 9.99999974E-6 : f32
    %113 = vector.broadcast %cst_42 : f32 to vector<1x64xf32>
    %114 = arith.addf %112, %113 : vector<1x64xf32>
    %115 = math.rsqrt %114 : vector<1x64xf32>
    %116 = vector.broadcast %115 : vector<1x64xf32> to vector<8x64xf32>
    %117 = arith.mulf %107, %116 : vector<8x64xf32>
    %c392 = arith.constant 392 : index
    %c0_43 = arith.constant 0 : index
    %118 = vector.load %arg3[%c392, %c0_43] : memref<408x128xf32, #tpu.memory_space<vmem>>, vector<1x64xf32>
    %119 = vector.broadcast %118 : vector<1x64xf32> to vector<8x64xf32>
    %120 = arith.mulf %117, %119 : vector<8x64xf32>
    %c393 = arith.constant 393 : index
    %c0_44 = arith.constant 0 : index
    %121 = vector.load %arg3[%c393, %c0_44] : memref<408x128xf32, #tpu.memory_space<vmem>>, vector<1x64xf32>
    %122 = vector.broadcast %121 : vector<1x64xf32> to vector<8x64xf32>
    %123 = arith.addf %120, %122 : vector<8x64xf32>
    %cst_45 = arith.constant 0.000000e+00 : f32
    %124 = vector.broadcast %cst_45 : f32 to vector<8x64xf32>
    %125 = arith.cmpf oge, %123, %124 : vector<8x64xf32>
    %126 = vector.broadcast %2 : f32 to vector<8x64xf32>
    %127 = arith.mulf %126, %123 : vector<8x64xf32>
    %128 = arith.select %125, %123, %127 : vector<8x64xi1>, vector<8x64xf32>
    %c168 = arith.constant 168 : index
    %c0_46 = arith.constant 0 : index
    %129 = vector.load %arg3[%c168, %c0_46] : memref<408x128xf32, #tpu.memory_space<vmem>>, vector<64x32xf32>
    %cst_47 = arith.constant dense<0.000000e+00> : vector<8x32xf32>
    %130 = tpu.matmul %128, %129, %cst_47 {dimension_numbers = #tpu.dot_dimension_numbers<[1], [0], [0], [1], [0, 0, 1, 1], [], []>} : vector<8x64xf32>, vector<64x32xf32>, vector<8x32xf32> -> vector<8x32xf32>
    %c394 = arith.constant 394 : index
    %c0_48 = arith.constant 0 : index
    %131 = vector.load %arg3[%c394, %c0_48] : memref<408x128xf32, #tpu.memory_space<vmem>>, vector<1x32xf32>
    %132 = vector.broadcast %131 : vector<1x32xf32> to vector<8x32xf32>
    %133 = arith.addf %130, %132 : vector<8x32xf32>
    %cst_49 = arith.constant dense<0.000000e+00> : vector<32xf32>
    %134 = vector.multi_reduction <add>, %133, %cst_49 [0] : vector<8x32xf32> to vector<32xf32>
    %135 = vector.shape_cast %134 : vector<32xf32> to vector<1x32xf32>
    %cst_50 = arith.constant 8.000000e+00 : f32
    %136 = vector.broadcast %cst_50 : f32 to vector<1x32xf32>
    %137 = arith.divf %135, %136 : vector<1x32xf32>
    %138 = vector.broadcast %137 : vector<1x32xf32> to vector<8x32xf32>
    %139 = arith.subf %133, %138 : vector<8x32xf32>
    %140 = arith.mulf %139, %139 : vector<8x32xf32>
    %cst_51 = arith.constant dense<0.000000e+00> : vector<32xf32>
    %141 = vector.multi_reduction <add>, %140, %cst_51 [0] : vector<8x32xf32> to vector<32xf32>
    %142 = vector.shape_cast %141 : vector<32xf32> to vector<1x32xf32>
    %cst_52 = arith.constant 8.000000e+00 : f32
    %143 = vector.broadcast %cst_52 : f32 to vector<1x32xf32>
    %144 = arith.divf %142, %143 : vector<1x32xf32>
    %cst_53 = arith.constant 9.99999974E-6 : f32
    %145 = vector.broadcast %cst_53 : f32 to vector<1x32xf32>
    %146 = arith.addf %144, %145 : vector<1x32xf32>
    %147 = math.rsqrt %146 : vector<1x32xf32>
    %148 = vector.broadcast %147 : vector<1x32xf32> to vector<8x32xf32>
    %149 = arith.mulf %139, %148 : vector<8x32xf32>
    %c395 = arith.constant 395 : index
    %c0_54 = arith.constant 0 : index
    %150 = vector.load %arg3[%c395, %c0_54] : memref<408x128xf32, #tpu.memory_space<vmem>>, vector<1x32xf32>
    %151 = vector.broadcast %150 : vector<1x32xf32> to vector<8x32xf32>
    %152 = arith.mulf %149, %151 : vector<8x32xf32>
    %c396 = arith.constant 396 : index
    %c0_55 = arith.constant 0 : index
    %153 = vector.load %arg3[%c396, %c0_55] : memref<408x128xf32, #tpu.memory_space<vmem>>, vector<1x32xf32>
    %154 = vector.broadcast %153 : vector<1x32xf32> to vector<8x32xf32>
    %155 = arith.addf %152, %154 : vector<8x32xf32>
    %cst_56 = arith.constant 0.000000e+00 : f32
    %156 = vector.broadcast %cst_56 : f32 to vector<8x32xf32>
    %157 = arith.cmpf oge, %155, %156 : vector<8x32xf32>
    %158 = vector.broadcast %3 : f32 to vector<8x32xf32>
    %159 = arith.mulf %158, %155 : vector<8x32xf32>
    %160 = arith.select %157, %155, %159 : vector<8x32xi1>, vector<8x32xf32>
    %c232 = arith.constant 232 : index
    %c0_57 = arith.constant 0 : index
    %161 = vector.load %arg3[%c232, %c0_57] : memref<408x128xf32, #tpu.memory_space<vmem>>, vector<32x32xf32>
    %cst_58 = arith.constant dense<0.000000e+00> : vector<8x32xf32>
    %162 = tpu.matmul %160, %161, %cst_58 {dimension_numbers = #tpu.dot_dimension_numbers<[1], [0], [0], [1], [0, 0, 1, 1], [], []>} : vector<8x32xf32>, vector<32x32xf32>, vector<8x32xf32> -> vector<8x32xf32>
    %c397 = arith.constant 397 : index
    %c0_59 = arith.constant 0 : index
    %163 = vector.load %arg3[%c397, %c0_59] : memref<408x128xf32, #tpu.memory_space<vmem>>, vector<1x32xf32>
    %164 = vector.broadcast %163 : vector<1x32xf32> to vector<8x32xf32>
    %165 = arith.addf %162, %164 : vector<8x32xf32>
    %166 = vector.extract_strided_slice %165 {offsets = [0, 0], sizes = [8, 16], strides = [1, 1]} : vector<8x32xf32> to vector<8x16xf32>
    %167 = vector.extract_strided_slice %165 {offsets = [0, 16], sizes = [8, 16], strides = [1, 1]} : vector<8x32xf32> to vector<8x16xf32>
    %cst_60 = arith.constant 5.000000e-01 : f32
    %168 = vector.broadcast %cst_60 : f32 to vector<8x16xf32>
    %169 = arith.mulf %168, %167 : vector<8x16xf32>
    %170 = math.exp %169 : vector<8x16xf32>
    %171 = arith.mulf %7, %170 : vector<8x16xf32>
    %172 = arith.addf %171, %166 : vector<8x16xf32>
    %173 = vector.broadcast %94 : vector<8x1xi32> to vector<8x8xi32>
    %174 = arith.cmpi eq, %86, %173 : vector<8x8xi32>
    %175 = arith.extui %174 : vector<8x8xi1> to vector<8x8xi32>
    %176 = arith.sitofp %175 : vector<8x8xi32> to vector<8x8xf32>
    %c264 = arith.constant 264 : index
    %c0_61 = arith.constant 0 : index
    %177 = vector.load %arg3[%c264, %c0_61] : memref<408x128xf32, #tpu.memory_space<vmem>>, vector<8x32xf32>
    %cst_62 = arith.constant dense<0.000000e+00> : vector<8x32xf32>
    %178 = tpu.matmul %176, %177, %cst_62 {dimension_numbers = #tpu.dot_dimension_numbers<[1], [0], [0], [1], [0, 0, 1, 1], [], []>} : vector<8x8xf32>, vector<8x32xf32>, vector<8x32xf32> -> vector<8x32xf32>
    %179 = vector.extract_strided_slice %178 {offsets = [0, 0], sizes = [8, 16], strides = [1, 1]} : vector<8x32xf32> to vector<8x16xf32>
    %180 = vector.extract_strided_slice %178 {offsets = [0, 16], sizes = [8, 16], strides = [1, 1]} : vector<8x32xf32> to vector<8x16xf32>
    %c272 = arith.constant 272 : index
    %c0_63 = arith.constant 0 : index
    %181 = vector.load %arg3[%c272, %c0_63] : memref<408x128xf32, #tpu.memory_space<vmem>>, vector<16x32xf32>
    %cst_64 = arith.constant dense<0.000000e+00> : vector<8x32xf32>
    %182 = tpu.matmul %172, %181, %cst_64 {dimension_numbers = #tpu.dot_dimension_numbers<[1], [0], [0], [1], [0, 0, 1, 1], [], []>} : vector<8x16xf32>, vector<16x32xf32>, vector<8x32xf32> -> vector<8x32xf32>
    %c398 = arith.constant 398 : index
    %c0_65 = arith.constant 0 : index
    %183 = vector.load %arg3[%c398, %c0_65] : memref<408x128xf32, #tpu.memory_space<vmem>>, vector<1x32xf32>
    %184 = vector.broadcast %183 : vector<1x32xf32> to vector<8x32xf32>
    %185 = arith.addf %182, %184 : vector<8x32xf32>
    %cst_66 = arith.constant dense<0.000000e+00> : vector<32xf32>
    %186 = vector.multi_reduction <add>, %185, %cst_66 [0] : vector<8x32xf32> to vector<32xf32>
    %187 = vector.shape_cast %186 : vector<32xf32> to vector<1x32xf32>
    %cst_67 = arith.constant 8.000000e+00 : f32
    %188 = vector.broadcast %cst_67 : f32 to vector<1x32xf32>
    %189 = arith.divf %187, %188 : vector<1x32xf32>
    %190 = vector.broadcast %189 : vector<1x32xf32> to vector<8x32xf32>
    %191 = arith.subf %185, %190 : vector<8x32xf32>
    %192 = arith.mulf %191, %191 : vector<8x32xf32>
    %cst_68 = arith.constant dense<0.000000e+00> : vector<32xf32>
    %193 = vector.multi_reduction <add>, %192, %cst_68 [0] : vector<8x32xf32> to vector<32xf32>
    %194 = vector.shape_cast %193 : vector<32xf32> to vector<1x32xf32>
    %cst_69 = arith.constant 8.000000e+00 : f32
    %195 = vector.broadcast %cst_69 : f32 to vector<1x32xf32>
    %196 = arith.divf %194, %195 : vector<1x32xf32>
    %cst_70 = arith.constant 9.99999974E-6 : f32
    %197 = vector.broadcast %cst_70 : f32 to vector<1x32xf32>
    %198 = arith.addf %196, %197 : vector<1x32xf32>
    %199 = math.rsqrt %198 : vector<1x32xf32>
    %200 = vector.broadcast %199 : vector<1x32xf32> to vector<8x32xf32>
    %201 = arith.mulf %191, %200 : vector<8x32xf32>
    %c399 = arith.constant 399 : index
    %c0_71 = arith.constant 0 : index
    %202 = vector.load %arg3[%c399, %c0_71] : memref<408x128xf32, #tpu.memory_space<vmem>>, vector<1x32xf32>
    %203 = vector.broadcast %202 : vector<1x32xf32> to vector<8x32xf32>
    %204 = arith.mulf %201, %203 : vector<8x32xf32>
    %c400 = arith.constant 400 : index
    %c0_72 = arith.constant 0 : index
    %205 = vector.load %arg3[%c400, %c0_72] : memref<408x128xf32, #tpu.memory_space<vmem>>, vector<1x32xf32>
    %206 = vector.broadcast %205 : vector<1x32xf32> to vector<8x32xf32>
    %207 = arith.addf %204, %206 : vector<8x32xf32>
    %cst_73 = arith.constant 0.000000e+00 : f32
    %208 = vector.broadcast %cst_73 : f32 to vector<8x32xf32>
    %209 = arith.cmpf oge, %207, %208 : vector<8x32xf32>
    %210 = vector.broadcast %4 : f32 to vector<8x32xf32>
    %211 = arith.mulf %210, %207 : vector<8x32xf32>
    %212 = arith.select %209, %207, %211 : vector<8x32xi1>, vector<8x32xf32>
    %c288 = arith.constant 288 : index
    %c0_74 = arith.constant 0 : index
    %213 = vector.load %arg3[%c288, %c0_74] : memref<408x128xf32, #tpu.memory_space<vmem>>, vector<32x64xf32>
    %cst_75 = arith.constant dense<0.000000e+00> : vector<8x64xf32>
    %214 = tpu.matmul %212, %213, %cst_75 {dimension_numbers = #tpu.dot_dimension_numbers<[1], [0], [0], [1], [0, 0, 1, 1], [], []>} : vector<8x32xf32>, vector<32x64xf32>, vector<8x64xf32> -> vector<8x64xf32>
    %c401 = arith.constant 401 : index
    %c0_76 = arith.constant 0 : index
    %215 = vector.load %arg3[%c401, %c0_76] : memref<408x128xf32, #tpu.memory_space<vmem>>, vector<1x64xf32>
    %216 = vector.broadcast %215 : vector<1x64xf32> to vector<8x64xf32>
    %217 = arith.addf %214, %216 : vector<8x64xf32>
    %cst_77 = arith.constant dense<0.000000e+00> : vector<64xf32>
    %218 = vector.multi_reduction <add>, %217, %cst_77 [0] : vector<8x64xf32> to vector<64xf32>
    %219 = vector.shape_cast %218 : vector<64xf32> to vector<1x64xf32>
    %cst_78 = arith.constant 8.000000e+00 : f32
    %220 = vector.broadcast %cst_78 : f32 to vector<1x64xf32>
    %221 = arith.divf %219, %220 : vector<1x64xf32>
    %222 = vector.broadcast %221 : vector<1x64xf32> to vector<8x64xf32>
    %223 = arith.subf %217, %222 : vector<8x64xf32>
    %224 = arith.mulf %223, %223 : vector<8x64xf32>
    %cst_79 = arith.constant dense<0.000000e+00> : vector<64xf32>
    %225 = vector.multi_reduction <add>, %224, %cst_79 [0] : vector<8x64xf32> to vector<64xf32>
    %226 = vector.shape_cast %225 : vector<64xf32> to vector<1x64xf32>
    %cst_80 = arith.constant 8.000000e+00 : f32
    %227 = vector.broadcast %cst_80 : f32 to vector<1x64xf32>
    %228 = arith.divf %226, %227 : vector<1x64xf32>
    %cst_81 = arith.constant 9.99999974E-6 : f32
    %229 = vector.broadcast %cst_81 : f32 to vector<1x64xf32>
    %230 = arith.addf %228, %229 : vector<1x64xf32>
    %231 = math.rsqrt %230 : vector<1x64xf32>
    %232 = vector.broadcast %231 : vector<1x64xf32> to vector<8x64xf32>
    %233 = arith.mulf %223, %232 : vector<8x64xf32>
    %c402 = arith.constant 402 : index
    %c0_82 = arith.constant 0 : index
    %234 = vector.load %arg3[%c402, %c0_82] : memref<408x128xf32, #tpu.memory_space<vmem>>, vector<1x64xf32>
    %235 = vector.broadcast %234 : vector<1x64xf32> to vector<8x64xf32>
    %236 = arith.mulf %233, %235 : vector<8x64xf32>
    %c403 = arith.constant 403 : index
    %c0_83 = arith.constant 0 : index
    %237 = vector.load %arg3[%c403, %c0_83] : memref<408x128xf32, #tpu.memory_space<vmem>>, vector<1x64xf32>
    %238 = vector.broadcast %237 : vector<1x64xf32> to vector<8x64xf32>
    %239 = arith.addf %236, %238 : vector<8x64xf32>
    %cst_84 = arith.constant 0.000000e+00 : f32
    %240 = vector.broadcast %cst_84 : f32 to vector<8x64xf32>
    %241 = arith.cmpf oge, %239, %240 : vector<8x64xf32>
    %242 = vector.broadcast %5 : f32 to vector<8x64xf32>
    %243 = arith.mulf %242, %239 : vector<8x64xf32>
    %244 = arith.select %241, %239, %243 : vector<8x64xi1>, vector<8x64xf32>
    %c320 = arith.constant 320 : index
    %c0_85 = arith.constant 0 : index
    %245 = vector.load %arg3[%c320, %c0_85] : memref<408x128xf32, #tpu.memory_space<vmem>>, vector<64x32xf32>
    %cst_86 = arith.constant dense<0.000000e+00> : vector<8x32xf32>
    %246 = tpu.matmul %244, %245, %cst_86 {dimension_numbers = #tpu.dot_dimension_numbers<[1], [0], [0], [1], [0, 0, 1, 1], [], []>} : vector<8x64xf32>, vector<64x32xf32>, vector<8x32xf32> -> vector<8x32xf32>
    %c404 = arith.constant 404 : index
    %c0_87 = arith.constant 0 : index
    %247 = vector.load %arg3[%c404, %c0_87] : memref<408x128xf32, #tpu.memory_space<vmem>>, vector<1x32xf32>
    %248 = vector.broadcast %247 : vector<1x32xf32> to vector<8x32xf32>
    %249 = arith.addf %246, %248 : vector<8x32xf32>
    %250 = tpu.concatenate %249, %172, %166, %167, %76, %85, %179, %180 in 1 : vector<8x32xf32>, vector<8x16xf32>, vector<8x16xf32>, vector<8x16xf32>, vector<8x8xf32>, vector<8x8xf32>, vector<8x16xf32>, vector<8x16xf32> -> vector<8x128xf32>
    %c0_88 = arith.constant 0 : index
    %c0_89 = arith.constant 0 : index
    %251 = vector.load %arg4[%c0_88, %c0_89] : memref<8x128xf32, #tpu.memory_space<vmem>>, vector<8x128xf32>
    tpu.vector_store %arg4[%c0_88, %c0_89], %250 {strides = array<i32>} : memref<8x128xf32, #tpu.memory_space<vmem>>, vector<8x128xf32>,
    return
  }
}

</mosaic_0001>

<llo_original>
// kernel: gmvae_forward.1
$region0: #{gmvae_forward.1}
  #allocation0 [shape = 'u32[]', space=smem, size = 0x4, offset = 0x4, fixed_abs, tag = 'smem constant byte address 0x4 - core index']
  #allocation1 [shape = 'u32[72,128]{1,0:T(1,128)}', space=vmem, size = 0x9000, scoped, tag = 'internal scratch']
  %s0 = inlined_call_operand.hbm [shape: f32[8,32], index: 0, kind: input, shape index: {}]
  %s1 = inlined_call_operand.hbm [shape: f32[8,16], index: 1, kind: input, shape index: {}]
  %s2 = inlined_call_operand.vmem [shape: f32[6], index: 2, kind: input, shape index: {}]
  %s3 = inlined_call_operand.hbm [shape: f32[408,128], index: 3, kind: input, shape index: {}]
  %s4 = inlined_call_operand.vmem [shape: f32[8,128], index: 4, kind: output, shape index: {0}]
  %s5 = inlined_call_operand.vmem [shape: s32[8,1], index: 5, kind: output, shape index: {1}]
  %6 = xla_tuple %s4, %s5
  %s7 = sld [smem:[#allocation0]]
  $region50: #{gmvae_forward.1} parent=0
    _
  %s9 = ssub.s32 1, %s7
  %s10 = scalar_select 0, %s9, %s7
  $region1: #{gmvae_forward.1} parent=0
    #allocation2 [shape = 'u8[4096]{0}', space=vmem, size = 0x1000, scoped, tag = 'input window, operand 0, single buffered']
    #allocation3 [shape = 's32[1]{0}', space=sflag, size = 0x4, scoped, tag = 'scoped memory for gmvae_forward.1']
    #allocation4 [shape = 's32[1]{0}', space=sflag, size = 0x4, scoped, tag = 'scoped memory for gmvae_forward.1']
    #allocation5 [shape = 'u8[4096]{0}', space=vmem, size = 0x1000, scoped, tag = 'input window, operand 1, single buffered']
    #allocation6 [shape = 's32[1]{0}', space=sflag, size = 0x4, scoped, tag = 'scoped memory for gmvae_forward.1']
    #allocation7 [shape = 'u8[512]{0}', space=smem, size = 0x200, scoped, tag = 'input window, operand 2, single buffered']
    #allocation8 [shape = 'u8[208896]{0}', space=vmem, size = 0x33000, scoped, tag = 'input window, operand 3, single buffered']
    %11 = vsyncpa [#allocation3], 0
    %12 = vsyncpa [#allocation6], 0
    %13 = vsyncpa [#allocation4], 0
    // Predicated region
    $region2: #{gmvae_forward.1} parent=1 // pred_check
      _
    $region3: #{gmvae_forward.1} parent=1 // pred_check_branch
      %15 = sbr.rel (0) target = $region5
    $region4: #{gmvae_forward.1} parent=1 // pred_region
      %17 = vsyncadd [#allocation3], 0
      %s19 = sshll.u32 %s0, 4
      %s20 = int_to_ptr.hbm [resolvable:$true] %s19
      %s21 = sshll.u32 [#allocation2], 4
      %s22 = int_to_ptr.vmem [resolvable:$true] %s21
      %24 = dma.hbm_to_vmem [thread:$0]  %s20, 128, %s22, [#allocation3]
    $region5: #{gmvae_forward.1} parent=1 // pred_fallthru
      _
    // Predicated region
    $region6: #{gmvae_forward.1} parent=1 // pred_check
      _
    $region7: #{gmvae_forward.1} parent=1 // pred_check_branch
      %26 = sbr.rel (0) target = $region9
    $region8: #{gmvae_forward.1} parent=1 // pred_region
      %28 = vsyncadd [#allocation6], 0
      %s30 = sshll.u32 %s1, 4
      %s31 = int_to_ptr.hbm [resolvable:$true] %s30
      %s32 = sshll.u32 [#allocation5], 4
      %s33 = int_to_ptr.vmem [resolvable:$true] %s32
      %35 = dma.hbm_to_vmem [thread:$0]  %s31, 128, %s33, [#allocation6]
    $region9: #{gmvae_forward.1} parent=1 // pred_fallthru
      _
    // Predicated region
    $region10: #{gmvae_forward.1} parent=1 // pred_check
      _
    $region11: #{gmvae_forward.1} parent=1 // pred_check_branch
      %37 = sbr.rel (0) target = $region13
    $region12: #{gmvae_forward.1} parent=1 // pred_region
      %39 = vsyncadd [#allocation4], 0
      %s41 = sshll.u32 %s2, 4
      %s42 = int_to_ptr.vmem [resolvable:$true] %s41
      %44 = dma.vmem_to_smem %s42, 16, [#allocation7], [#allocation4]
    $region13: #{gmvae_forward.1} parent=1 // pred_fallthru
      _
    // Predicated region
    $region14: #{gmvae_forward.1} parent=1 // pred_check
      _
    $region15: #{gmvae_forward.1} parent=1 // pred_check_branch
      %46 = sbr.rel (0) target = $region17
    $region16: #{gmvae_forward.1} parent=1 // pred_region
      %48 = vsyncadd [#allocation6], 0
      %s49 = sshll.u32 %s3, 4
      %s50 = int_to_ptr.hbm [resolvable:$true] %s49
      %s51 = sshll.u32 [#allocation8], 4
      %s52 = int_to_ptr.vmem [resolvable:$true] %s51
      %57 = dma.hbm_to_vmem [thread:$0]  %s50, 6528, %s52, [#allocation6], 128, 128, 8
    $region17: #{gmvae_forward.1} parent=1 // pred_fallthru
      _
    // Predicated region
    $region18: #{gmvae_forward.1} parent=1 // pred_check
      _
    $region19: #{gmvae_forward.1} parent=1 // pred_check_branch
      %59 = sbr.rel (0) target = $region21
    $region20: #{gmvae_forward.1} parent=1 // pred_region
      %61 = dma.done [#allocation3], 128
    $region21: #{gmvae_forward.1} parent=1 // pred_fallthru
      _
    // Predicated region
    $region22: #{gmvae_forward.1} parent=1 // pred_check
      _
    $region23: #{gmvae_forward.1} parent=1 // pred_check_branch
      %63 = sbr.rel (0) target = $region25
    $region24: #{gmvae_forward.1} parent=1 // pred_region
      %65 = dma.done [#allocation6], 128
    $region25: #{gmvae_forward.1} parent=1 // pred_fallthru
      _
    // Predicated region
    $region26: #{gmvae_forward.1} parent=1 // pred_check
      _
    $region27: #{gmvae_forward.1} parent=1 // pred_check_branch
      %67 = sbr.rel (0) target = $region29
    $region28: #{gmvae_forward.1} parent=1 // pred_region
      %69 = dma.done [#allocation4], 16
    $region29: #{gmvae_forward.1} parent=1 // pred_fallthru
      _
    // Predicated region
    $region30: #{gmvae_forward.1} parent=1 // pred_check
      _
    $region31: #{gmvae_forward.1} parent=1 // pred_check_branch
      %71 = sbr.rel (0) target = $region33
    $region32: #{gmvae_forward.1} parent=1 // pred_region
      %73 = dma.done [#allocation6], 6528
    $region33: #{gmvae_forward.1} parent=1 // pred_fallthru
      _
    %74 = sfence
    %s75 = sld [smem:[#allocation7]]
    %s76 = sld [smem:[#allocation7 + $0x1]]
    %s77 = sld [smem:[#allocation7 + $0x2]]
    %s78 = sld [smem:[#allocation7 + $0x3]]
    %s79 = sld [smem:[#allocation7 + $0x4]]
    %s80 = sld [smem:[#allocation7 + $0x5]]
    %v81 = vld [vmem:[#allocation2] sm:$0xff]
    %v82 = vld [vmem:[#allocation5] sm:$0xff]
    %v83 = vld [vmem:[#allocation8] sm:$0xff]
    %v84 = vld [vmem:[#allocation8 + $0x8] sm:$0xff]
    %v85 = vld [vmem:[#allocation8 + $0x10] sm:$0xff]
    %v86 = vld [vmem:[#allocation8 + $0x18] sm:$0xff]
    %v87 = vld [vmem:[#allocation8 + $0x180] sm:$0x1]
    %v88 = vperm.slane %v87, 0
    %vm89 = vcmask 261120
    %v91 = vsel %vm89, %v81, 0
    %93 = vmatpush.msra.mxu0 0.0
    %94 = vmatpush.msra.mxu0 0.0
    %95 = vmatpush.msra.mxu0 0.0
    %96 = vmatpush.msra.mxu0 0.0
    %97 = vmatpush.msra.mxu0 0.0
    %98 = vmatpush.msra.mxu0 0.0
    %99 = vmatpush.msra.mxu0 0.0
    %100 = vmatpush.msra.mxu0 0.0
    %101 = vmatpush.msra.mxu0 0.0
    %102 = vmatpush.msra.mxu0 0.0
    %103 = vmatpush.msra.mxu0 0.0
    %104 = vmatpush.msra.mxu0 0.0
    %105 = vmatpush.msra.mxu0 %v86
    %106 = vmatpush.msra.mxu0 %v85
    %107 = vmatpush.msra.mxu0 %v84
    %108 = vmatpush.msra.mxu0 %v83
    %109 = vmatmul.f32.gmra.mxu0 %v91
    %v110 = vpop.f32.mrf.mxu0
    %v111 = vadd.f32 %v88, %v110
    %112 = vdwg.mxu0
    %vm113 = vcmask 523264
    %v114 = vsel %vm113, %v111, 0.0
    %v115 = vrot.slane %v114, 4
    %v116 = vadd.f32 %v114, %v115
    %v117 = vrot.slane %v116, 2
    %v118 = vadd.f32 %v116, %v117
    %v119 = vrot.slane %v118, 1
    %v120 = vadd.f32 %v118, %v119
    %v121 = vrcp.pop 8.0
    %v122 = vmul.f32 8.0, %v121
    %v123 = vsub.f32 1.0, %v122
    %v124 = vmul.f32 %v121, %v123
    %v125 = vadd.f32 %v121, %v124
    %vm126 = vweird.f32 %v121
    %v127 = vsel %vm126, %v121, %v125
    %v128 = vmul.f32 %v120, %v127
    %v129 = vsub.f32 %v111, %v128
    %v130 = vmul.f32 %v129, %v129
    %v131 = vsel %vm113, %v130, 0.0
    %v132 = vrot.slane %v131, 4
    %v133 = vadd.f32 %v131, %v132
    %v134 = vrot.slane %v133, 2
    %v135 = vadd.f32 %v133, %v134
    %v136 = vrot.slane %v135, 1
    %v137 = vadd.f32 %v135, %v136
    %v138 = vmul.f32 %v137, %v127
    %v139 = vadd.f32 %v138, 1e-05
    %v140 = vrsqrt.pop %v139
    %v141 = vmul.f32 %v140, %v139
    %v142 = vmul.f32 %v141, %v140
    %v143 = vmul.f32 0.5, %v142
    %v144 = vsub.f32 1.5, %v143
    %v145 = vmul.f32 %v140, %v144
    %vm146 = vweird.f32 %v139
    %vm147 = vweird.f32 %v140
    %vm148 = vmor %vm146, %vm147
    %v149 = vsel %vm148, %v140, %v145
    %v150 = vmul.f32 %v129, %v149
    %v151 = vld [vmem:[#allocation8 + $0x181] sm:$0x1]
    %v152 = vperm.slane %v151, 0
    %v153 = vmul.f32 %v150, %v152
    %v154 = vld [vmem:[#allocation8 + $0x182] sm:$0x1]
    %v155 = vperm.slane %v154, 0
    %v156 = vadd.f32 %v153, %v155
    %vm157 = vcmp.ge.f32.partialorder %v156, 0.0
    %v158 = vstv %s75
    %v159 = vmul.f32 %v158, %v156
    %v160 = vsel %vm157, %v156, %v159
    %v161 = vld [vmem:[#allocation8 + $0x20] sm:$0xff]
    %v162 = vld [vmem:[#allocation8 + $0x28] sm:$0xff]
    %v163 = vld [vmem:[#allocation8 + $0x30] sm:$0xff]
    %v164 = vld [vmem:[#allocation8 + $0x38] sm:$0xff]
    %v165 = vld [vmem:[#allocation8 + $0x40] sm:$0xff]
    %v166 = vld [vmem:[#allocation8 + $0x48] sm:$0xff]
    %v167 = vld [vmem:[#allocation8 + $0x50] sm:$0xff]
    %v168 = vld [vmem:[#allocation8 + $0x58] sm:$0xff]
    %v169 = vld [vmem:[#allocation8 + $0x183] sm:$0x1]
    %v170 = vperm.slane %v169, 0
    %v172 = vsel %vm113, %v160, 0
    %174 = vmatpush.msra.mxu0 0.0
    %175 = vmatpush.msra.mxu0 0.0
    %176 = vmatpush.msra.mxu0 0.0
    %177 = vmatpush.msra.mxu0 0.0
    %178 = vmatpush.msra.mxu0 0.0
    %179 = vmatpush.msra.mxu0 0.0
    %180 = vmatpush.msra.mxu0 0.0
    %181 = vmatpush.msra.mxu0 0.0
    %182 = vmatpush.msra.mxu0 %v168
    %183 = vmatpush.msra.mxu0 %v167
    %184 = vmatpush.msra.mxu0 %v166
    %185 = vmatpush.msra.mxu0 %v165
    %186 = vmatpush.msra.mxu0 %v164
    %187 = vmatpush.msra.mxu0 %v163
    %188 = vmatpush.msra.mxu0 %v162
    %189 = vmatpush.msra.mxu0 %v161
    %190 = vmatmul.f32.gmra.mxu0 %v172
    %v191 = vpop.f32.mrf.mxu0
    %v192 = vadd.f32 %v170, %v191
    %193 = vdwg.mxu0
    %v194 = vsel %vm89, %v192, 0.0
    %v195 = vrot.slane %v194, 4
    %v196 = vadd.f32 %v194, %v195
    %v197 = vrot.slane %v196, 2
    %v198 = vadd.f32 %v196, %v197
    %v199 = vrot.slane %v198, 1
    %v200 = vadd.f32 %v198, %v199
    %v201 = vmul.f32 %v200, %v127
    %v202 = vsub.f32 %v192, %v201
    %v203 = vmul.f32 %v202, %v202
    %v204 = vsel %vm89, %v203, 0.0
    %v205 = vrot.slane %v204, 4
    %v206 = vadd.f32 %v204, %v205
    %v207 = vrot.slane %v206, 2
    %v208 = vadd.f32 %v206, %v207
    %v209 = vrot.slane %v208, 1
    %v210 = vadd.f32 %v208, %v209
    %v211 = vmul.f32 %v210, %v127
    %v212 = vadd.f32 %v211, 1e-05
    %v213 = vrsqrt.pop %v212
    %v214 = vmul.f32 %v213, %v212
    %v215 = vmul.f32 %v214, %v213
    %v216 = vmul.f32 0.5, %v215
    %v217 = vsub.f32 1.5, %v216
    %v218 = vmul.f32 %v213, %v217
    %vm219 = vweird.f32 %v212
    %vm220 = vweird.f32 %v213
    %vm221 = vmor %vm219, %vm220
    %v222 = vsel %vm221, %v213, %v218
    %v223 = vmul.f32 %v202, %v222
    %v224 = vld [vmem:[#allocation8 + $0x184] sm:$0x1]
    %v225 = vperm.slane %v224, 0
    %v226 = vmul.f32 %v223, %v225
    %v227 = vld [vmem:[#allocation8 + $0x185] sm:$0x1]
    %v228 = vperm.slane %v227, 0
    %v229 = vadd.f32 %v226, %v228
    %vm230 = vcmp.ge.f32.partialorder %v229, 0.0
    %v231 = vstv %s76
    %v232 = vmul.f32 %v231, %v229
    %v233 = vsel %vm230, %v229, %v232
    %v234 = vld [vmem:[#allocation8 + $0x60] sm:$0xff]
    %v235 = vld [vmem:[#allocation8 + $0x68] sm:$0xff]
    %v236 = vld [vmem:[#allocation8 + $0x70] sm:$0xff]
    %v237 = vld [vmem:[#allocation8 + $0x78] sm:$0xff]
    %v238 = vld [vmem:[#allocation8 + $0x186] sm:$0x1]
    %v239 = vperm.slane %v238, 0
    %v241 = vsel %vm89, %v233, 0
    %243 = vmatpush.msra.mxu0 0.0
    %244 = vmatpush.msra.mxu0 0.0
    %245 = vmatpush.msra.mxu0 0.0
    %246 = vmatpush.msra.mxu0 0.0
    %247 = vmatpush.msra.mxu0 0.0
    %248 = vmatpush.msra.mxu0 0.0
    %249 = vmatpush.msra.mxu0 0.0
    %250 = vmatpush.msra.mxu0 0.0
    %251 = vmatpush.msra.mxu0 0.0
    %252 = vmatpush.msra.mxu0 0.0
    %253 = vmatpush.msra.mxu0 0.0
    %254 = vmatpush.msra.mxu0 0.0
    %255 = vmatpush.msra.mxu0 %v237
    %256 = vmatpush.msra.mxu0 %v236
    %257 = vmatpush.msra.mxu0 %v235
    %258 = vmatpush.msra.mxu0 %v234
    %259 = vmatmul.f32.gmra.mxu0 %v241
    %v260 = vpop.f32.mrf.mxu0
    %v261 = vadd.f32 %v239, %v260
    %262 = vdwg.mxu0
    %vm263 = vcmask 64512
    %v264 = vsel %vm263, %v261, -inf
    %265 = vmax.xlane.f32.xlu0 %v264
    %v266 = vpop.xlane.xlu0 %265
    %v267 = vsub.f32 %v261, %v266
    %v268 = vmul.f32 %v267, 1.442695
    %v269 = vpow.pop %v268
    %v270 = vsel %vm263, %v269, 0.0
    %271 = vadd.xlane.f32.xlu0 %v270
    %v272 = vpop.xlane.xlu0 %271
    %v273 = vrcp.pop %v272
    %v274 = vmul.f32 %v272, %v273
    %v275 = vsub.f32 1.0, %v274
    %v276 = vmul.f32 %v273, %v275
    %v277 = vadd.f32 %v273, %v276
    %vm278 = vweird.f32 %v272
    %vm279 = vweird.f32 %v273
    %vm280 = vmor %vm278, %vm279
    %v281 = vsel %vm280, %v273, %v277
    %v282 = vand.u32 2147483647, %v272
    %vm283 = vcmp.eq.f32.partialorder %v282, 8.507059e+37
    %v284 = vand.u32 %v272, 2147483648
    %v285 = vor.u32 1.1754944e-38, %v284
    %v286 = vsel %vm283, %v285, %v281
    %v287 = vmul.f32 %v269, %v286
    %v288 = vlaneseq
    %v289 = vand.u32 %v288, 127
    %v290 = vsel %vm263, %v287, -inf
    %291 = vmax.xlane.f32.xlu0 %v290
    %v292 = vpop.xlane.xlu0 %291
    %vm293 = vcmp.ge.f32.partialorder %v287, %v292
    %v294 = vsel %vm293, %v289, 8
    %v295 = vsel %vm263, %v294, 2147483647
    %v296 = vand.u32 %v295, 65535
    %v297 = vshra.s32 %v295, 16
    %v298 = vcvt.s32.f32 %v296
    %v299 = vcvt.s32.f32 %v297
    %300 = vmin.xlane.f32.xlu0 %v299
    %v301 = vpop.xlane.xlu0 %300
    %vm302 = vcmp.eq.f32.partialorder %v299, %v301
    %v303 = vsel %vm302, %v298, inf
    %304 = vmin.xlane.f32.xlu0 %v303
    %v305 = vpop.xlane.xlu0 %304
    %v306 = vcvt.f32.s32 %v305
    %v307 = vcvt.f32.s32 %v301
    %v308 = vshll.u32 %v307, 16
    %v309 = vadd.s32 %v308, %v306
    %vm310 = vcmask 7168
    %311 = vst.msk [vmem:[%s5] sm:$0xff] %vm310, %v309
    %313 = vrot.lane.b32.xlu0 %v261, 32
    %v314 = vpop.permute.xlu0 %313
    %v316 = vsel %vm89, %v81, %v314
    %v317 = vld [vmem:[#allocation8 + $0x80] sm:$0xff]
    %v318 = vld [vmem:[#allocation8 + $0x88] sm:$0xff]
    %v319 = vld [vmem:[#allocation8 + $0x90] sm:$0xff]
    %v320 = vld [vmem:[#allocation8 + $0x98] sm:$0xff]
    %v321 = vld [vmem:[#allocation8 + $0xa0] sm:$0xff]
    %v322 = vld [vmem:[#allocation8 + $0x187] sm:$0x1]
    %v323 = vperm.slane %v322, 0
    %vm324 = vcmask 326656
    %v326 = vsel %vm324, %v316, 0
    %328 = vmatpush.msra.mxu0 0.0
    %329 = vmatpush.msra.mxu0 0.0
    %330 = vmatpush.msra.mxu0 0.0
    %331 = vmatpush.msra.mxu0 0.0
    %332 = vmatpush.msra.mxu0 0.0
    %333 = vmatpush.msra.mxu0 0.0
    %334 = vmatpush.msra.mxu0 0.0
    %335 = vmatpush.msra.mxu0 0.0
    %336 = vmatpush.msra.mxu0 0.0
    %337 = vmatpush.msra.mxu0 0.0
    %338 = vmatpush.msra.mxu0 0.0
    %339 = vmatpush.msra.mxu0 %v321
    %340 = vmatpush.msra.mxu0 %v320
    %341 = vmatpush.msra.mxu0 %v319
    %342 = vmatpush.msra.mxu0 %v318
    %343 = vmatpush.msra.mxu0 %v317
    %344 = vmatmul.f32.gmra.mxu0 %v326
    %v345 = vpop.f32.mrf.mxu0
    %v346 = vadd.f32 %v323, %v345
    %347 = vdwg.mxu0
    %v348 = vsel %vm113, %v346, 0.0
    %v349 = vrot.slane %v348, 4
    %v350 = vadd.f32 %v348, %v349
    %v351 = vrot.slane %v350, 2
    %v352 = vadd.f32 %v350, %v351
    %v353 = vrot.slane %v352, 1
    %v354 = vadd.f32 %v352, %v353
    %v355 = vmul.f32 %v354, %v127
    %v356 = vsub.f32 %v346, %v355
    %v357 = vmul.f32 %v356, %v356
    %v358 = vsel %vm113, %v357, 0.0
    %v359 = vrot.slane %v358, 4
    %v360 = vadd.f32 %v358, %v359
    %v361 = vrot.slane %v360, 2
    %v362 = vadd.f32 %v360, %v361
    %v363 = vrot.slane %v362, 1
    %v364 = vadd.f32 %v362, %v363
    %v365 = vmul.f32 %v364, %v127
    %v366 = vadd.f32 %v365, 1e-05
    %v367 = vrsqrt.pop %v366
    %v368 = vmul.f32 %v367, %v366
    %v369 = vmul.f32 %v368, %v367
    %v370 = vmul.f32 0.5, %v369
    %v371 = vsub.f32 1.5, %v370
    %v372 = vmul.f32 %v367, %v371
    %vm373 = vweird.f32 %v366
    %vm374 = vweird.f32 %v367
    %vm375 = vmor %vm373, %vm374
    %v376 = vsel %vm375, %v367, %v372
    %v377 = vmul.f32 %v356, %v376
    %v378 = vld [vmem:[#allocation8 + $0x188] sm:$0x1]
    %v379 = vperm.slane %v378, 0
    %v380 = vmul.f32 %v377, %v379
    %v381 = vld [vmem:[#allocation8 + $0x189] sm:$0x1]
    %v382 = vperm.slane %v381, 0
    %v383 = vadd.f32 %v380, %v382
    %vm384 = vcmp.ge.f32.partialorder %v383, 0.0
    %v385 = vstv %s77
    %v386 = vmul.f32 %v385, %v383
    %v387 = vsel %vm384, %v383, %v386
    %v388 = vld [vmem:[#allocation8 + $0xa8] sm:$0xff]
    %v389 = vld [vmem:[#allocation8 + $0xb0] sm:$0xff]
    %v390 = vld [vmem:[#allocation8 + $0xb8] sm:$0xff]
    %v391 = vld [vmem:[#allocation8 + $0xc0] sm:$0xff]
    %v392 = vld [vmem:[#allocation8 + $0xc8] sm:$0xff]
    %v393 = vld [vmem:[#allocation8 + $0xd0] sm:$0xff]
    %v394 = vld [vmem:[#allocation8 + $0xd8] sm:$0xff]
    %v395 = vld [vmem:[#allocation8 + $0xe0] sm:$0xff]
    %v396 = vld [vmem:[#allocation8 + $0x18a] sm:$0x1]
    %v397 = vperm.slane %v396, 0
    %v399 = vsel %vm113, %v387, 0
    %401 = vmatpush.msra.mxu0 0.0
    %402 = vmatpush.msra.mxu0 0.0
    %403 = vmatpush.msra.mxu0 0.0
    %404 = vmatpush.msra.mxu0 0.0
    %405 = vmatpush.msra.mxu0 0.0
    %406 = vmatpush.msra.mxu0 0.0
    %407 = vmatpush.msra.mxu0 0.0
    %408 = vmatpush.msra.mxu0 0.0
    %409 = vmatpush.msra.mxu0 %v395
    %410 = vmatpush.msra.mxu0 %v394
    %411 = vmatpush.msra.mxu0 %v393
    %412 = vmatpush.msra.mxu0 %v392
    %413 = vmatpush.msra.mxu0 %v391
    %414 = vmatpush.msra.mxu0 %v390
    %415 = vmatpush.msra.mxu0 %v389
    %416 = vmatpush.msra.mxu0 %v388
    %417 = vmatmul.f32.gmra.mxu0 %v399
    %v418 = vpop.f32.mrf.mxu0
    %v419 = vadd.f32 %v397, %v418
    %420 = vdwg.mxu0
    %v421 = vsel %vm89, %v419, 0.0
    %v422 = vrot.slane %v421, 4
    %v423 = vadd.f32 %v421, %v422
    %v424 = vrot.slane %v423, 2
    %v425 = vadd.f32 %v423, %v424
    %v426 = vrot.slane %v425, 1
    %v427 = vadd.f32 %v425, %v426
    %v428 = vmul.f32 %v427, %v127
    %v429 = vsub.f32 %v419, %v428
    %v430 = vmul.f32 %v429, %v429
    %v431 = vsel %vm89, %v430, 0.0
    %v432 = vrot.slane %v431, 4
    %v433 = vadd.f32 %v431, %v432
    %v434 = vrot.slane %v433, 2
    %v435 = vadd.f32 %v433, %v434
    %v436 = vrot.slane %v435, 1
    %v437 = vadd.f32 %v435, %v436
    %v438 = vmul.f32 %v437, %v127
    %v439 = vadd.f32 %v438, 1e-05
    %v440 = vrsqrt.pop %v439
    %v441 = vmul.f32 %v440, %v439
    %v442 = vmul.f32 %v441, %v440
    %v443 = vmul.f32 0.5, %v442
    %v444 = vsub.f32 1.5, %v443
    %v445 = vmul.f32 %v440, %v444
    %vm446 = vweird.f32 %v439
    %vm447 = vweird.f32 %v440
    %vm448 = vmor %vm446, %vm447
    %v449 = vsel %vm448, %v440, %v445
    %v450 = vmul.f32 %v429, %v449
    %v451 = vld [vmem:[#allocation8 + $0x18b] sm:$0x1]
    %v452 = vperm.slane %v451, 0
    %v453 = vmul.f32 %v450, %v452
    %v454 = vld [vmem:[#allocation8 + $0x18c] sm:$0x1]
    %v455 = vperm.slane %v454, 0
    %v456 = vadd.f32 %v453, %v455
    %vm457 = vcmp.ge.f32.partialorder %v456, 0.0
    %v458 = vstv %s78
    %v459 = vmul.f32 %v458, %v456
    %v460 = vsel %vm457, %v456, %v459
    %v461 = vld [vmem:[#allocation8 + $0xe8] sm:$0xff]
    %v462 = vld [vmem:[#allocation8 + $0xf0] sm:$0xff]
    %v463 = vld [vmem:[#allocation8 + $0xf8] sm:$0xff]
    %v464 = vld [vmem:[#allocation8 + $0x100] sm:$0xff]
    %v465 = vld [vmem:[#allocation8 + $0x18d] sm:$0x1]
    %v466 = vperm.slane %v465, 0
    %v468 = vsel %vm89, %v460, 0
    %470 = vmatpush.msra.mxu0 0.0
    %471 = vmatpush.msra.mxu0 0.0
    %472 = vmatpush.msra.mxu0 0.0
    %473 = vmatpush.msra.mxu0 0.0
    %474 = vmatpush.msra.mxu0 0.0
    %475 = vmatpush.msra.mxu0 0.0
    %476 = vmatpush.msra.mxu0 0.0
    %477 = vmatpush.msra.mxu0 0.0
    %478 = vmatpush.msra.mxu0 0.0
    %479 = vmatpush.msra.mxu0 0.0
    %480 = vmatpush.msra.mxu0 0.0
    %481 = vmatpush.msra.mxu0 0.0
    %482 = vmatpush.msra.mxu0 %v464
    %483 = vmatpush.msra.mxu0 %v463
    %484 = vmatpush.msra.mxu0 %v462
    %485 = vmatpush.msra.mxu0 %v461
    %486 = vmatmul.f32.gmra.mxu0 %v468
    %v487 = vpop.f32.mrf.mxu0
    %v488 = vadd.f32 %v466, %v487
    %489 = vdwg.mxu0
    %v490 = vmul.f32 %v488, 0.5
    %v491 = vmul.f32 %v490, 1.442695
    %v492 = vpow.pop %v491
    %494 = vrot.lane.b32.xlu0 %v492, 112
    %v495 = vpop.permute.xlu0 %494
    %v497 = vmul.f32 %v82, %v495
    %v498 = vadd.f32 %v497, %v488
    %vm499 = vcmp.eq.s32.totalorder %v289, %v309
    %v500 = vsel %vm499, 1, 0
    %v501 = vcvt.s32.f32 %v500
    %v502 = vld [vmem:[#allocation8 + $0x108] sm:$0xff]
    %v504 = vsel %vm263, %v501, 0
    %506 = vmatpush.msra.mxu0 0.0
    %507 = vmatpush.msra.mxu0 0.0
    %508 = vmatpush.msra.mxu0 0.0
    %509 = vmatpush.msra.mxu0 0.0
    %510 = vmatpush.msra.mxu0 0.0
    %511 = vmatpush.msra.mxu0 0.0
    %512 = vmatpush.msra.mxu0 0.0
    %513 = vmatpush.msra.mxu0 0.0
    %514 = vmatpush.msra.mxu0 0.0
    %515 = vmatpush.msra.mxu0 0.0
    %516 = vmatpush.msra.mxu0 0.0
    %517 = vmatpush.msra.mxu0 0.0
    %518 = vmatpush.msra.mxu0 0.0
    %519 = vmatpush.msra.mxu0 0.0
    %520 = vmatpush.msra.mxu0 0.0
    %521 = vmatpush.msra.mxu0 %v502
    %522 = vmatmul.f32.gmra.mxu0 %v504
    %v523 = vpop.f32.mrf.mxu0
    %v524 = vadd.f32 0.0, %v523
    %525 = vdwg.mxu0
    %v526 = vld [vmem:[#allocation8 + $0x110] sm:$0xff]
    %v527 = vld [vmem:[#allocation8 + $0x118] sm:$0xff]
    %v528 = vld [vmem:[#allocation8 + $0x18e] sm:$0x1]
    %v529 = vperm.slane %v528, 0
    %vm530 = vcmask 130048
    %v532 = vsel %vm530, %v498, 0
    %534 = vmatpush.msra.mxu0 0.0
    %535 = vmatpush.msra.mxu0 0.0
    %536 = vmatpush.msra.mxu0 0.0
    %537 = vmatpush.msra.mxu0 0.0
    %538 = vmatpush.msra.mxu0 0.0
    %539 = vmatpush.msra.mxu0 0.0
    %540 = vmatpush.msra.mxu0 0.0
    %541 = vmatpush.msra.mxu0 0.0
    %542 = vmatpush.msra.mxu0 0.0
    %543 = vmatpush.msra.mxu0 0.0
    %544 = vmatpush.msra.mxu0 0.0
    %545 = vmatpush.msra.mxu0 0.0
    %546 = vmatpush.msra.mxu0 0.0
    %547 = vmatpush.msra.mxu0 0.0
    %548 = vmatpush.msra.mxu0 %v527
    %549 = vmatpush.msra.mxu0 %v526
    %550 = vmatmul.f32.gmra.mxu0 %v532
    %v551 = vpop.f32.mrf.mxu0
    %v552 = vadd.f32 %v529, %v551
    %553 = vdwg.mxu0
    %v554 = vsel %vm89, %v552, 0.0
    %v555 = vrot.slane %v554, 4
    %v556 = vadd.f32 %v554, %v555
    %v557 = vrot.slane %v556, 2
    %v558 = vadd.f32 %v556, %v557
    %v559 = vrot.slane %v558, 1
    %v560 = vadd.f32 %v558, %v559
    %v561 = vmul.f32 %v560, %v127
    %v562 = vsub.f32 %v552, %v561
    %v563 = vmul.f32 %v562, %v562
    %v564 = vsel %vm89, %v563, 0.0
    %v565 = vrot.slane %v564, 4
    %v566 = vadd.f32 %v564, %v565
    %v567 = vrot.slane %v566, 2
    %v568 = vadd.f32 %v566, %v567
    %v569 = vrot.slane %v568, 1
    %v570 = vadd.f32 %v568, %v569
    %v571 = vmul.f32 %v570, %v127
    %v572 = vadd.f32 %v571, 1e-05
    %v573 = vrsqrt.pop %v572
    %v574 = vmul.f32 %v573, %v572
    %v575 = vmul.f32 %v574, %v573
    %v576 = vmul.f32 0.5, %v575
    %v577 = vsub.f32 1.5, %v576
    %v578 = vmul.f32 %v573, %v577
    %vm579 = vweird.f32 %v572
    %vm580 = vweird.f32 %v573
    %vm581 = vmor %vm579, %vm580
    %v582 = vsel %vm581, %v573, %v578
    %v583 = vmul.f32 %v562, %v582
    %v584 = vld [vmem:[#allocation8 + $0x18f] sm:$0x1]
    %v585 = vperm.slane %v584, 0
    %v586 = vmul.f32 %v583, %v585
    %v587 = vld [vmem:[#allocation8 + $0x190] sm:$0x1]
    %v588 = vperm.slane %v587, 0
    %v589 = vadd.f32 %v586, %v588
    %vm590 = vcmp.ge.f32.partialorder %v589, 0.0
    %v591 = vstv %s79
    %v592 = vmul.f32 %v591, %v589
    %v593 = vsel %vm590, %v589, %v592
    %v594 = vld [vmem:[#allocation8 + $0x120] sm:$0xff]
    %v595 = vld [vmem:[#allocation8 + $0x128] sm:$0xff]
    %v596 = vld [vmem:[#allocation8 + $0x130] sm:$0xff]
    %v597 = vld [vmem:[#allocation8 + $0x138] sm:$0xff]
    %v598 = vld [vmem:[#allocation8 + $0x191] sm:$0x1]
    %v599 = vperm.slane %v598, 0
    %v601 = vsel %vm89, %v593, 0
    %603 = vmatpush.msra.mxu0 0.0
    %604 = vmatpush.msra.mxu0 0.0
    %605 = vmatpush.msra.mxu0 0.0
    %606 = vmatpush.msra.mxu0 0.0
    %607 = vmatpush.msra.mxu0 0.0
    %608 = vmatpush.msra.mxu0 0.0
    %609 = vmatpush.msra.mxu0 0.0
    %610 = vmatpush.msra.mxu0 0.0
    %611 = vmatpush.msra.mxu0 0.0
    %612 = vmatpush.msra.mxu0 0.0
    %613 = vmatpush.msra.mxu0 0.0
    %614 = vmatpush.msra.mxu0 0.0
    %615 = vmatpush.msra.mxu0 %v597
    %616 = vmatpush.msra.mxu0 %v596
    %617 = vmatpush.msra.mxu0 %v595
    %618 = vmatpush.msra.mxu0 %v594
    %619 = vmatmul.f32.gmra.mxu0 %v601
    %v620 = vpop.f32.mrf.mxu0
    %v621 = vadd.f32 %v599, %v620
    %622 = vdwg.mxu0
    %v623 = vsel %vm113, %v621, 0.0
    %v624 = vrot.slane %v623, 4
    %v625 = vadd.f32 %v623, %v624
    %v626 = vrot.slane %v625, 2
    %v627 = vadd.f32 %v625, %v626
    %v628 = vrot.slane %v627, 1
    %v629 = vadd.f32 %v627, %v628
    %v630 = vmul.f32 %v629, %v127
    %v631 = vsub.f32 %v621, %v630
    %v632 = vmul.f32 %v631, %v631
    %v633 = vsel %vm113, %v632, 0.0
    %v634 = vrot.slane %v633, 4
    %v635 = vadd.f32 %v633, %v634
    %v636 = vrot.slane %v635, 2
    %v637 = vadd.f32 %v635, %v636
    %v638 = vrot.slane %v637, 1
    %v639 = vadd.f32 %v637, %v638
    %v640 = vmul.f32 %v639, %v127
    %v641 = vadd.f32 %v640, 1e-05
    %v642 = vrsqrt.pop %v641
    %v643 = vmul.f32 %v642, %v641
    %v644 = vmul.f32 %v643, %v642
    %v645 = vmul.f32 0.5, %v644
    %v646 = vsub.f32 1.5, %v645
    %v647 = vmul.f32 %v642, %v646
    %vm648 = vweird.f32 %v641
    %vm649 = vweird.f32 %v642
    %vm650 = vmor %vm648, %vm649
    %v651 = vsel %vm650, %v642, %v647
    %v652 = vmul.f32 %v631, %v651
    %v653 = vld [vmem:[#allocation8 + $0x192] sm:$0x1]
    %v654 = vperm.slane %v653, 0
    %v655 = vmul.f32 %v652, %v654
    %v656 = vld [vmem:[#allocation8 + $0x193] sm:$0x1]
    %v657 = vperm.slane %v656, 0
    %v658 = vadd.f32 %v655, %v657
    %vm659 = vcmp.ge.f32.partialorder %v658, 0.0
    %v660 = vstv %s80
    %v661 = vmul.f32 %v660, %v658
    %v662 = vsel %vm659, %v658, %v661
    %v663 = vld [vmem:[#allocation8 + $0x140] sm:$0xff]
    %v664 = vld [vmem:[#allocation8 + $0x148] sm:$0xff]
    %v665 = vld [vmem:[#allocation8 + $0x150] sm:$0xff]
    %v666 = vld [vmem:[#allocation8 + $0x158] sm:$0xff]
    %v667 = vld [vmem:[#allocation8 + $0x160] sm:$0xff]
    %v668 = vld [vmem:[#allocation8 + $0x168] sm:$0xff]
    %v669 = vld [vmem:[#allocation8 + $0x170] sm:$0xff]
    %v670 = vld [vmem:[#allocation8 + $0x178] sm:$0xff]
    %v671 = vld [vmem:[#allocation8 + $0x194] sm:$0x1]
    %v672 = vperm.slane %v671, 0
    %v674 = vsel %vm113, %v662, 0
    %676 = vmatpush.msra.mxu0 0.0
    %677 = vmatpush.msra.mxu0 0.0
    %678 = vmatpush.msra.mxu0 0.0
    %679 = vmatpush.msra.mxu0 0.0
    %680 = vmatpush.msra.mxu0 0.0
    %681 = vmatpush.msra.mxu0 0.0
    %682 = vmatpush.msra.mxu0 0.0
    %683 = vmatpush.msra.mxu0 0.0
    %684 = vmatpush.msra.mxu0 %v670
    %685 = vmatpush.msra.mxu0 %v669
    %686 = vmatpush.msra.mxu0 %v668
    %687 = vmatpush.msra.mxu0 %v667
    %688 = vmatpush.msra.mxu0 %v666
    %689 = vmatpush.msra.mxu0 %v665
    %690 = vmatpush.msra.mxu0 %v664
    %691 = vmatpush.msra.mxu0 %v663
    %692 = vmatmul.f32.gmra.mxu0 %v674
    %v693 = vpop.f32.mrf.mxu0
    %v694 = vadd.f32 %v672, %v693
    %695 = vdwg.mxu0
    %696 = vrot.lane.b32.xlu0 %v498, 32
    %v697 = vpop.permute.xlu0 %696
    %700 = vrot.lane.b32.xlu0 %v488, 48
    %v701 = vpop.permute.xlu0 %700
    %703 = vrot.lane.b32.xlu0 %v261, 80
    %v704 = vpop.permute.xlu0 %703
    %707 = vrot.lane.b32.xlu0 %v287, 88
    %v708 = vpop.permute.xlu0 %707
    %711 = vrot.lane.b32.xlu0 %v524, 96
    %v712 = vpop.permute.xlu0 %711
    %v714 = vsel %vm89, %v694, %v697
    %vm715 = vcmask 392192
    %v716 = vsel %vm715, %v714, %v701
    %v717 = vsel %vm113, %v716, %v701
    %vm718 = vcmask 654336
    %v719 = vsel %vm718, %v717, %v704
    %vm720 = vcmask 719872
    %v721 = vsel %vm720, %v719, %v708
    %vm722 = vcmask 785408
    %v723 = vsel %vm722, %v721, %v712
    %vm724 = vcmask 916480
    %v725 = vsel %vm724, %v723, %v712
    %726 = vst [vmem:[%s4] sm:$0xff] %v725
    // Predicated region
    $region34: #{gmvae_forward.1} parent=1 // pred_check
      _
    $region35: #{gmvae_forward.1} parent=1 // pred_check_branch
      %728 = sbr.rel (0) target = $region37
    $region36: #{gmvae_forward.1} parent=1 // pred_region
      _
    $region37: #{gmvae_forward.1} parent=1 // pred_fallthru
      _
    // Predicated region
    $region38: #{gmvae_forward.1} parent=1 // pred_check
      _
    $region39: #{gmvae_forward.1} parent=1 // pred_check_branch
      %730 = sbr.rel (0) target = $region41
    $region40: #{gmvae_forward.1} parent=1 // pred_region
      _
    $region41: #{gmvae_forward.1} parent=1 // pred_fallthru
      _
    // Predicated region
    $region42: #{gmvae_forward.1} parent=1 // pred_check
      _
    $region43: #{gmvae_forward.1} parent=1 // pred_check_branch
      %732 = sbr.rel (0) target = $region45
    $region44: #{gmvae_forward.1} parent=1 // pred_region
      _
    $region45: #{gmvae_forward.1} parent=1 // pred_fallthru
      _
    // Predicated region
    $region46: #{gmvae_forward.1} parent=1 // pred_check
      _
    $region47: #{gmvae_forward.1} parent=1 // pred_check_branch
      %734 = sbr.rel (0) target = $region49
    $region48: #{gmvae_forward.1} parent=1 // pred_region
      _
    $region49: #{gmvae_forward.1} parent=1 // pred_fallthru
      _
    %735 = vsyncpa [#allocation3], 1
    %736 = vsyncpa [#allocation6], 1
    %737 = vsyncpa [#allocation4], 1

</llo_original>
